<compile_context>
chip_gen: v6e
topology: v6e:2x2x1
jax: 0.10.0
libtpu: 0.0.40
codegen_flags: <defaults>
</compile_context>

<pallas_src>
import math

import jax
import jax.numpy as jnp
from jax.experimental import pallas as pl
from jax.experimental.pallas import tpu as pltpu


def _cdf_pdf_kernel(x_ref, cdf_ref, pdf_ref, *, a_erf, b_erf, inv_s, m_scaled,
                    pdf_scale):
    x = x_ref[...].astype(jnp.float32)
    # Normal CDF: 0.5 * (1 + erf((x - m) / (s*sqrt(2)))) with constants pre-folded.
    cdf = 0.5 * (1.0 + jax.lax.erf(x * a_erf - b_erf))
    # 2 * Normal PDF: 2 * exp(-0.5 z^2) / (s * sqrt(2*pi)),  z = x*inv_s - m*inv_s.
    z = x * inv_s - m_scaled
    pdf2 = jnp.exp(-0.5 * (z * z)) * pdf_scale
    cdf_ref[...] = cdf.astype(cdf_ref.dtype)
    pdf_ref[...] = pdf2.astype(pdf_ref.dtype)


def cdf_forward(tensor, m, s, *, lane=512, tile_rows=1024):
    """Returns (weight_cdf, weight_pdf) matching the PyTorch module semantics."""
    orig_shape = tensor.shape
    orig_dtype = tensor.dtype
    n = tensor.size

    m = float(m)
    s = float(s)
    inv_s = 1.0 / s
    a_erf = inv_s / math.sqrt(2.0)          # erf argument scale
    b_erf = m * a_erf                       # erf argument shift
    m_scaled = m * inv_s
    pdf_scale = 2.0 / (s * math.sqrt(2.0 * math.pi))

    flat = jnp.ravel(tensor)

    # Rows needed for a (rows, lane) slab; keep rows a multiple of 8 (sublanes).
    rows = -(-n // lane)
    rows = ((rows + 7) // 8) * 8

    tile_rows = min(tile_rows, rows)
    # Split into >=2 grid steps when there's enough data (megacore on v7x).
    if rows // tile_rows < 2 and rows >= 16:
        tile_rows = max(8, ((rows // 2) // 8) * 8)

    grid_len = -(-rows // tile_rows)
    rows = grid_len * tile_rows             # pad rows up instead of shrinking tiles
    total = rows * lane

    if total != n:
        flat = jnp.concatenate(
            [flat, jnp.zeros((total - n,), dtype=orig_dtype)])
    x2d = flat.reshape(rows, lane)

    kernel = lambda x_ref, c_ref, p_ref: _cdf_pdf_kernel(
        x_ref, c_ref, p_ref,
        a_erf=a_erf, b_erf=b_erf, inv_s=inv_s, m_scaled=m_scaled,
        pdf_scale=pdf_scale)

    cdf_out, pdf_out = pl.pallas_call(
        kernel,
        out_shape=(
            jax.ShapeDtypeStruct((rows, lane), orig_dtype),
            jax.ShapeDtypeStruct((rows, lane), orig_dtype),
        ),
        grid_spec=pl.GridSpec(
            grid=(grid_len,),
            in_specs=[pl.BlockSpec((tile_rows, lane), lambda i: (i, 0))],
            out_specs=[
                pl.BlockSpec((tile_rows, lane), lambda i: (i, 0)),
                pl.BlockSpec((tile_rows, lane), lambda i: (i, 0)),
            ],
        ),
        compiler_params=pltpu.CompilerParams(
            dimension_semantics=("parallel",)),
    )(x2d)

    if total == n:
        weight_cdf = cdf_out.reshape(orig_shape)
        weight_pdf = pdf_out.reshape(orig_shape)
    else:
        weight_cdf = jnp.ravel(cdf_out)[:n].reshape(orig_shape)
        weight_pdf = jnp.ravel(pdf_out)[:n].reshape(orig_shape)
    return weight_cdf, weight_pdf


if __name__ == "__main__":
    key = jax.random.PRNGKey(0)
    # Small shape consistent with a conv feature map (NCHW).
    x = jax.random.normal(key, (2, 4, 16, 16), dtype=jnp.float32)

    m, s = 0.0, 1.0  # module constants from __init__
    weight_cdf, weight_pdf = cdf_forward(x, m, s)
    jax.block_until_ready((weight_cdf, weight_pdf))

    # Reference check in plain JAX.
    z = (x - m) / s
    ref_cdf = 0.5 * (1.0 + jax.lax.erf(z / jnp.sqrt(2.0)))
    ref_pdf = 2.0 * jnp.exp(-0.5 * z * z) / (s * jnp.sqrt(2.0 * jnp.pi))
    assert jnp.allclose(weight_cdf, ref_cdf, atol=1e-5)
    assert jnp.allclose(weight_pdf, ref_pdf, atol=1e-5)
    assert weight_cdf.shape == x.shape and weight_pdf.shape == x.shape

    print("KERNEL_OK")
</pallas_src>

<mosaic_0001>
module attributes {stable_mosaic.version = 11 : i64} {
  func.func @_lambda_(%arg0: i32, %arg1: memref<8x512xf32, #tpu.memory_space<vmem>>, %arg2: memref<8x512xf32, #tpu.memory_space<vmem>>, %arg3: memref<8x512xf32, #tpu.memory_space<vmem>>) attributes {dimension_semantics = [#tpu.dimension_semantics<parallel>], iteration_bounds = array<i64: 1>, scalar_prefetch = 0 : i64, scratch_operands = 0 : i64, tpu.core_type = #tpu.core_type<tc>, window_params = [{transform_indices = @transform_0, window_bounds = array<i64: 8, 512>}, {transform_indices = @transform_1, window_bounds = array<i64: 8, 512>}, {transform_indices = @transform_2, window_bounds = array<i64: 8, 512>}]} {
    %c0 = arith.constant 0 : index
    %c0_0 = arith.constant 0 : index
    %0 = vector.load %arg1[%c0, %c0_0] : memref<8x512xf32, #tpu.memory_space<vmem>>, vector<8x512xf32>
    %cst = arith.constant 0.707106769 : f32
    %1 = vector.broadcast %cst : f32 to vector<8x512xf32>
    %2 = arith.mulf %0, %1 : vector<8x512xf32>
    %cst_1 = arith.constant 0.000000e+00 : f32
    %3 = vector.broadcast %cst_1 : f32 to vector<8x512xf32>
    %4 = arith.subf %2, %3 : vector<8x512xf32>
    %5 = math.erf %4 : vector<8x512xf32>
    %cst_2 = arith.constant 1.000000e+00 : f32
    %6 = vector.broadcast %cst_2 : f32 to vector<8x512xf32>
    %7 = arith.addf %6, %5 : vector<8x512xf32>
    %cst_3 = arith.constant 5.000000e-01 : f32
    %8 = vector.broadcast %cst_3 : f32 to vector<8x512xf32>
    %9 = arith.mulf %8, %7 : vector<8x512xf32>
    %cst_4 = arith.constant 1.000000e+00 : f32
    %10 = vector.broadcast %cst_4 : f32 to vector<8x512xf32>
    %11 = arith.mulf %0, %10 : vector<8x512xf32>
    %cst_5 = arith.constant 0.000000e+00 : f32
    %12 = vector.broadcast %cst_5 : f32 to vector<8x512xf32>
    %13 = arith.subf %11, %12 : vector<8x512xf32>
    %14 = arith.mulf %13, %13 : vector<8x512xf32>
    %cst_6 = arith.constant -5.000000e-01 : f32
    %15 = vector.broadcast %cst_6 : f32 to vector<8x512xf32>
    %16 = arith.mulf %15, %14 : vector<8x512xf32>
    %17 = math.exp %16 : vector<8x512xf32>
    %cst_7 = arith.constant 0.797884583 : f32
    %18 = vector.broadcast %cst_7 : f32 to vector<8x512xf32>
    %19 = arith.mulf %17, %18 : vector<8x512xf32>
    %c0_8 = arith.constant 0 : index
    %c0_9 = arith.constant 0 : index
    %20 = vector.load %arg2[%c0_8, %c0_9] : memref<8x512xf32, #tpu.memory_space<vmem>>, vector<8x512xf32>
    tpu.vector_store %arg2[%c0_8, %c0_9], %9 {strides = array<i32>} : memref<8x512xf32, #tpu.memory_space<vmem>>, vector<8x512xf32>,
    %c0_10 = arith.constant 0 : index
    %c0_11 = arith.constant 0 : index
    %21 = vector.load %arg3[%c0_10, %c0_11] : memref<8x512xf32, #tpu.memory_space<vmem>>, vector<8x512xf32>
    tpu.vector_store %arg3[%c0_10, %c0_11], %19 {strides = array<i32>} : memref<8x512xf32, #tpu.memory_space<vmem>>, vector<8x512xf32>,
    return
  }
  func.func @transform_0(%arg0: i32) -> (i32, i32) {
    %c0_i32 = arith.constant 0 : i32
    %c0_i32_0 = arith.constant 0 : i32
    return %arg0, %c0_i32 : i32, i32
  }
  func.func @transform_1(%arg0: i32) -> (i32, i32) {
    %c0_i32 = arith.constant 0 : i32
    %c0_i32_0 = arith.constant 0 : i32
    return %arg0, %c0_i32 : i32, i32
  }
  func.func @transform_2(%arg0: i32) -> (i32, i32) {
    %c0_i32 = arith.constant 0 : i32
    %c0_i32_0 = arith.constant 0 : i32
    return %arg0, %c0_i32 : i32, i32
  }
}

</mosaic_0001>

<llo_original>
// kernel: tpu_custom_call.1
$region0: #{tpu_custom_call.1}
  #allocation0 [shape = 'u32[]', space=smem, size = 0x4, offset = 0x4, fixed_abs, tag = 'smem constant byte address 0x4 - core index']
  #allocation1 [shape = 'u32[144,128]{1,0:T(1,128)}', space=vmem, size = 0x12000, scoped, tag = 'internal scratch']
  %s0 = inlined_call_operand.hbm [shape: f32[8,512], index: 0, kind: input, shape index: {}]
  %s1 = inlined_call_operand.hbm [shape: f32[8,512], index: 1, kind: output, shape index: {0}]
  %s2 = inlined_call_operand.hbm [shape: f32[8,512], index: 2, kind: output, shape index: {1}]
  %3 = xla_tuple %s1, %s2
  %s4 = sld [smem:[#allocation0]]
  $region26: #{tpu_custom_call.1} parent=0
    _
  %s6 = ssub.s32 1, %s4
  %s7 = scalar_select 0, %s6, %s4
  $region1: #{tpu_custom_call.1} parent=0
    #allocation2 [shape = 'u8[16384]{0}', space=vmem, size = 0x4000, scoped, tag = 'input window, operand 0, single buffered']
    #allocation3 [shape = 's32[1]{0}', space=sflag, size = 0x4, scoped, tag = 'scoped memory for tpu_custom_call.1']
    #allocation4 [shape = 's32[1]{0}', space=sflag, size = 0x4, scoped, tag = 'scoped memory for tpu_custom_call.1']
    #allocation5 [shape = 'u8[16384]{0}', space=vmem, size = 0x4000, scoped, tag = 'output window, operand 0, single buffered']
    #allocation6 [shape = 'u8[16384]{0}', space=vmem, size = 0x4000, scoped, tag = 'output window, operand 1, single buffered']
    #allocation7 [shape = 's32[1]{0}', space=sflag, size = 0x4, scoped, tag = 'scoped memory for tpu_custom_call.1']
    %8 = vsyncpa [#allocation3], 0
    %9 = vsyncpa [#allocation4], 0
    %10 = vsyncpa [#allocation7], 0
    // Predicated region
    $region2: #{tpu_custom_call.1} parent=1 // pred_check
      _
    $region3: #{tpu_custom_call.1} parent=1 // pred_check_branch
      %12 = sbr.rel (0) target = $region5
    $region4: #{tpu_custom_call.1} parent=1 // pred_region
      %s14 = ssub.s32 512, 512
      %15 = vsyncadd [#allocation3], %s14
      %s17 = sshll.u32 [#allocation2], 4
      %s18 = int_to_ptr.vmem [resolvable:$true] %s17
      %20 = dma.hbm_to_vmem [thread:$0]  %s0, 512, %s18, [#allocation3]
    $region5: #{tpu_custom_call.1} parent=1 // pred_fallthru
      _
    // Predicated region
    $region6: #{tpu_custom_call.1} parent=1 // pred_check
      _
    $region7: #{tpu_custom_call.1} parent=1 // pred_check_branch
      %22 = sbr.rel (0) target = $region9
    $region8: #{tpu_custom_call.1} parent=1 // pred_region
      %23 = dma.done [#allocation3], 512
    $region9: #{tpu_custom_call.1} parent=1 // pred_fallthru
      _
    %v24 = vld [vmem:[#allocation2] sm:$0xff]
    %v25 = vld [vmem:[#allocation2 + $0x8] sm:$0xff]
    %v26 = vld [vmem:[#allocation2 + $0x10] sm:$0xff]
    %v27 = vld [vmem:[#allocation2 + $0x18] sm:$0xff]
    %v28 = vmul.f32 %v24, 0.70710677
    %v29 = vmul.f32 %v25, 0.70710677
    %v30 = vmul.f32 %v26, 0.70710677
    %v31 = vmul.f32 %v27, 0.70710677
    %v32 = verf.f32.pop %v28
    %v33 = verf.f32.pop %v29
    %v34 = verf.f32.pop %v30
    %v35 = verf.f32.pop %v31
    %v36 = vadd.f32 %v32, 1.0
    %v37 = vadd.f32 %v33, 1.0
    %v38 = vadd.f32 %v34, 1.0
    %v39 = vadd.f32 %v35, 1.0
    %v40 = vmul.f32 %v36, 0.5
    %v41 = vmul.f32 %v37, 0.5
    %v42 = vmul.f32 %v38, 0.5
    %v43 = vmul.f32 %v39, 0.5
    %v44 = vmul.f32 %v24, %v24
    %v45 = vmul.f32 %v25, %v25
    %v46 = vmul.f32 %v26, %v26
    %v47 = vmul.f32 %v27, %v27
    %v48 = vmul.f32 %v44, -0.5
    %v49 = vmul.f32 %v45, -0.5
    %v50 = vmul.f32 %v46, -0.5
    %v51 = vmul.f32 %v47, -0.5
    %v52 = vmul.f32 %v48, 1.442695
    %v53 = vpow.pop %v52
    %v54 = vmul.f32 %v49, 1.442695
    %v55 = vpow.pop %v54
    %v56 = vmul.f32 %v50, 1.442695
    %v57 = vpow.pop %v56
    %v58 = vmul.f32 %v51, 1.442695
    %v59 = vpow.pop %v58
    %v60 = vmul.f32 %v53, 0.7978846
    %v61 = vmul.f32 %v55, 0.7978846
    %v62 = vmul.f32 %v57, 0.7978846
    %v63 = vmul.f32 %v59, 0.7978846
    %64 = vst [vmem:[#allocation5] sm:$0xff] %v40
    %65 = vst [vmem:[#allocation5 + $0x8] sm:$0xff] %v41
    %66 = vst [vmem:[#allocation5 + $0x10] sm:$0xff] %v42
    %67 = vst [vmem:[#allocation5 + $0x18] sm:$0xff] %v43
    %68 = vst [vmem:[#allocation6] sm:$0xff] %v60
    %69 = vst [vmem:[#allocation6 + $0x8] sm:$0xff] %v61
    %70 = vst [vmem:[#allocation6 + $0x10] sm:$0xff] %v62
    %71 = vst [vmem:[#allocation6 + $0x18] sm:$0xff] %v63
    // Predicated region
    $region10: #{tpu_custom_call.1} parent=1 // pred_check
      _
    $region11: #{tpu_custom_call.1} parent=1 // pred_check_branch
      %73 = sbr.rel (0) target = $region13
    $region12: #{tpu_custom_call.1} parent=1 // pred_region
      %s75 = ssub.s32 512, 512
      %76 = vsyncadd [#allocation4], %s75
      %s78 = sshll.u32 [#allocation5], 4
      %s79 = int_to_ptr.vmem [resolvable:$true] %s78
      %81 = dma.vmem_to_hbm [thread:$0]  %s79, 512, %s1, [#allocation4]
    $region13: #{tpu_custom_call.1} parent=1 // pred_fallthru
      _
    // Predicated region
    $region14: #{tpu_custom_call.1} parent=1 // pred_check
      _
    $region15: #{tpu_custom_call.1} parent=1 // pred_check_branch
      %83 = sbr.rel (0) target = $region17
    $region16: #{tpu_custom_call.1} parent=1 // pred_region
      %s85 = ssub.s32 512, 512
      %86 = vsyncadd [#allocation7], %s85
      %s88 = sshll.u32 [#allocation6], 4
      %s89 = int_to_ptr.vmem [resolvable:$true] %s88
      %91 = dma.vmem_to_hbm [thread:$0]  %s89, 512, %s2, [#allocation7]
    $region17: #{tpu_custom_call.1} parent=1 // pred_fallthru
      _
    // Predicated region
    $region18: #{tpu_custom_call.1} parent=1 // pred_check
      _
    $region19: #{tpu_custom_call.1} parent=1 // pred_check_branch
      %93 = sbr.rel (0) target = $region21
    $region20: #{tpu_custom_call.1} parent=1 // pred_region
      %94 = dma.done [#allocation4], 512
    $region21: #{tpu_custom_call.1} parent=1 // pred_fallthru
      _
    // Predicated region
    $region22: #{tpu_custom_call.1} parent=1 // pred_check
      _
    $region23: #{tpu_custom_call.1} parent=1 // pred_check_branch
      %96 = sbr.rel (0) target = $region25
    $region24: #{tpu_custom_call.1} parent=1 // pred_region
      %97 = dma.done [#allocation7], 512
    $region25: #{tpu_custom_call.1} parent=1 // pred_fallthru
      _
    %98 = vsyncpa [#allocation3], 1
    %99 = vsyncpa [#allocation4], 1
    %100 = vsyncpa [#allocation7], 1

</llo_original>
